<compile_context>
chip_gen: v5e
topology: v5e:2x2
jax: 0.10.0
libtpu: 0.0.40
codegen_flags: <defaults>
</compile_context>

<pallas_src>
import numpy as np
import jax
import jax.numpy as jnp
from jax import lax
from jax.experimental import pallas as pl
from jax.experimental.pallas import tpu as pltpu


TILE = 128   # pixel (lane) block
BB = 8       # image (sublane) block


def _lovasz_kernel(gts_ref, err_ref, gt_ref, out_ref, carry_ref):
    k = pl.program_id(1)

    @pl.when(k == 0)
    def _init():
        carry_ref[...] = jnp.zeros_like(carry_ref)
        out_ref[...] = jnp.zeros_like(out_ref)

    gt_blk = gt_ref[...]            # (BB, TILE) f32, entries 0/1, sorted order
    err_blk = err_ref[...]          # (BB, TILE) f32, errors sorted descending
    G = gts_ref[...]                # (BB, 1)   f32, total positives per image

    bb, t = gt_blk.shape

    # Lower-triangular (inclusive-prefix) cumsum operator, built in-register.
    # bf16 operands are exactly 0/1 and accumulation is f32 -> exact cumsum.
    csum_tile = (
        lax.broadcasted_iota(jnp.int32, (t, t), 0)
        <= lax.broadcasted_iota(jnp.int32, (t, t), 1)
    ).astype(jnp.bfloat16)

    carry = carry_ref[...]                                          # (BB, 1)
    cs = carry + jnp.dot(gt_blk.astype(jnp.bfloat16), csum_tile,
                         preferred_element_type=jnp.float32)        # cumsum(gt)
    carry_ref[...] = carry + jnp.sum(gt_blk, axis=1, keepdims=True)

    # Global 0-based pixel index j for each lane of this block.
    col = (lax.broadcasted_iota(jnp.int32, (bb, t), 1) + k * t).astype(jnp.float32)

    # jaccard[j]   = 1 - (G - cs[j]) / (G + (j+1) - cs[j])
    # jaccard[j-1] = 1 - (G - cs[j-1]) / (G + j - cs[j-1]),  cs[j-1] = cs[j]-gt[j]
    # grad[j]      = jaccard[j] - jaccard[j-1]   (grad[0] = jaccard[0])
    i_cur = G - cs
    u_cur = G + (col + 1.0) - cs                   # >= 1 always
    i_prev = i_cur + gt_blk                        # == G - cs[j-1] (exact ints)
    u_prev = G + col - cs + gt_blk                 # == 0 only at j==0 with G==0
    ok = u_prev > 0.5
    jac_cur = 1.0 - i_cur / u_cur
    jac_prev = 1.0 - jnp.where(ok, i_prev, 1.0) / jnp.where(ok, u_prev, 1.0)
    grad = jac_cur - jac_prev

    out_ref[...] += jnp.sum(jnp.maximum(err_blk, 0.0) * grad,
                            axis=1, keepdims=True)


def lovasz_hinge_loss(logits, targets):
    """logits, targets: (B, 1, H, W). Returns scalar f32 loss (per_image=True)."""
    B = logits.shape[0]
    logits2 = logits.reshape(B, -1).astype(jnp.float32)    # squeeze(1) + flatten
    labels2 = targets.reshape(B, -1).astype(jnp.float32)
    P = logits2.shape[1]

    signs = 2.0 * labels2 - 1.0
    errors = 1.0 - logits2 * signs

    # TODO(synk): descending sort has no clean Pallas TPU primitive; one stable
    # key-value sort (keyed on -errors, carrying labels) stays in XLA.
    neg_sorted, gt_sorted = lax.sort((-errors, labels2), dimension=1, num_keys=1)
    errors_sorted = -neg_sorted

    gts = jnp.sum(labels2, axis=1, keepdims=True)          # per-image positives

    # Pad rows to a sublane multiple and pixels to a lane-block multiple.
    # Zero padding is neutral: relu(0) = 0, and padded pixels sit after all real
    # (sorted) pixels so real-pixel cumsums / grads are unchanged.
    B_pad = pl.cdiv(B, BB) * BB
    P_pad = pl.cdiv(P, TILE) * TILE
    if B_pad != B or P_pad != P:
        errors_sorted = jnp.pad(errors_sorted, ((0, B_pad - B), (0, P_pad - P)))
        gt_sorted = jnp.pad(gt_sorted, ((0, B_pad - B), (0, P_pad - P)))
        gts = jnp.pad(gts, ((0, B_pad - B), (0, 0)))

    per_img = pl.pallas_call(
        _lovasz_kernel,
        out_shape=jax.ShapeDtypeStruct((B_pad, 1), jnp.float32),
        grid_spec=pltpu.PrefetchScalarGridSpec(
            num_scalar_prefetch=0,
            grid=(B_pad // BB, P_pad // TILE),
            in_specs=[
                pl.BlockSpec((BB, 1), lambda i, k: (i, 0)),       # gts
                pl.BlockSpec((BB, TILE), lambda i, k: (i, k)),    # errors_sorted
                pl.BlockSpec((BB, TILE), lambda i, k: (i, k)),    # gt_sorted
            ],
            out_specs=pl.BlockSpec((BB, 1), lambda i, k: (i, 0)),
            scratch_shapes=[pltpu.VMEM((BB, 1), jnp.float32)],
        ),
        compiler_params=pltpu.CompilerParams(
            dimension_semantics=("parallel", "arbitrary")),
    )(gts, errors_sorted, gt_sorted)

    return jnp.mean(per_img[:B, 0])


def _lovasz_hinge_ref(logits, targets):
    """Pure-JAX reference mirroring the PyTorch implementation."""
    B = logits.shape[0]
    logits2 = logits.reshape(B, -1).astype(jnp.float32)
    labels2 = targets.reshape(B, -1).astype(jnp.float32)
    losses = []
    for b in range(B):
        x = logits2[b]
        y = labels2[b]
        signs = 2.0 * y - 1.0
        errors = 1.0 - x * signs
        order = jnp.argsort(-errors)
        errors_sorted = errors[order]
        gt_sorted = y[order]
        gts = jnp.sum(gt_sorted)
        intersection = gts - jnp.cumsum(gt_sorted)
        union = gts + jnp.cumsum(1.0 - gt_sorted)
        jaccard = 1.0 - intersection / union
        grad = jnp.concatenate([jaccard[:1], jaccard[1:] - jaccard[:-1]])
        losses.append(jnp.dot(jnp.maximum(errors_sorted, 0.0), grad))
    return jnp.mean(jnp.stack(losses))


if __name__ == "__main__":
    key = jax.random.PRNGKey(0)
    k1, k2 = jax.random.split(key)

    B, C, H, W = 2, 1, 16, 16  # module squeezes dim 1 -> channel must be 1
    logits = jax.random.normal(k1, (B, C, H, W), dtype=jnp.float32)
    targets = (jax.random.uniform(k2, (B, C, H, W)) > 0.5).astype(jnp.float32)

    loss = jax.block_until_ready(lovasz_hinge_loss(logits, targets))
    ref = jax.block_until_ready(_lovasz_hinge_ref(logits, targets))

    if not np.isfinite(float(loss)):
        raise RuntimeError("non-finite loss from Pallas kernel")
    if abs(float(loss) - float(ref)) > 1e-4:
        raise RuntimeError(f"mismatch: pallas={float(loss)} ref={float(ref)}")

    print("KERNEL_OK")
</pallas_src>

<mosaic_0001>
module attributes {stable_mosaic.version = 11 : i64} {
  func.func @_lovasz_kernel(%arg0: i32, %arg1: i32, %arg2: memref<8x1xf32, #tpu.memory_space<vmem>>, %arg3: memref<8x128xf32, #tpu.memory_space<vmem>>, %arg4: memref<8x128xf32, #tpu.memory_space<vmem>>, %arg5: memref<8x1xf32, #tpu.memory_space<vmem>>, %arg6: memref<8x1xf32, #tpu.memory_space<vmem>>) attributes {dimension_semantics = [#tpu.dimension_semantics<parallel>, #tpu.dimension_semantics<arbitrary>], iteration_bounds = array<i64: 1, 2>, scalar_prefetch = 0 : i64, scratch_operands = 1 : i64, tpu.core_type = #tpu.core_type<tc>, window_params = [{transform_indices = @transform_0, window_bounds = array<i64: 8, 1>}, {transform_indices = @transform_1, window_bounds = array<i64: 8, 128>}, {transform_indices = @transform_2, window_bounds = array<i64: 8, 128>}, {transform_indices = @transform_3, window_bounds = array<i64: 8, 1>}]} {
    %c0_i32 = arith.constant 0 : i32
    %0 = arith.cmpi eq, %arg1, %c0_i32 : i32
    %1 = arith.extui %0 : i1 to i32
    %c0_i32_0 = arith.constant 0 : i32
    %2 = arith.cmpi ne, %1, %c0_i32_0 : i32
    scf.if %2 {
      %cst_23 = arith.constant 0.000000e+00 : f32
      %59 = vector.broadcast %cst_23 : f32 to vector<8x1xf32>
      %c0_24 = arith.constant 0 : index
      %c0_25 = arith.constant 0 : index
      %60 = vector.load %arg6[%c0_24, %c0_25] : memref<8x1xf32, #tpu.memory_space<vmem>>, vector<8x1xf32>
      tpu.vector_store %arg6[%c0_24, %c0_25], %59 {strides = array<i32>} : memref<8x1xf32, #tpu.memory_space<vmem>>, vector<8x1xf32>,
      %cst_26 = arith.constant 0.000000e+00 : f32
      %61 = vector.broadcast %cst_26 : f32 to vector<8x1xf32>
      %c0_27 = arith.constant 0 : index
      %c0_28 = arith.constant 0 : index
      %62 = vector.load %arg5[%c0_27, %c0_28] : memref<8x1xf32, #tpu.memory_space<vmem>>, vector<8x1xf32>
      tpu.vector_store %arg5[%c0_27, %c0_28], %61 {strides = array<i32>} : memref<8x1xf32, #tpu.memory_space<vmem>>, vector<8x1xf32>,
    } else {
    }
    %c0 = arith.constant 0 : index
    %c0_1 = arith.constant 0 : index
    %3 = vector.load %arg4[%c0, %c0_1] : memref<8x128xf32, #tpu.memory_space<vmem>>, vector<8x128xf32>
    %c0_2 = arith.constant 0 : index
    %c0_3 = arith.constant 0 : index
    %4 = vector.load %arg3[%c0_2, %c0_3] : memref<8x128xf32, #tpu.memory_space<vmem>>, vector<8x128xf32>
    %c0_4 = arith.constant 0 : index
    %c0_5 = arith.constant 0 : index
    %5 = vector.load %arg2[%c0_4, %c0_5] : memref<8x1xf32, #tpu.memory_space<vmem>>, vector<8x1xf32>
    %6 = tpu.iota {dimensions = array<i32: 0>} : vector<128x128xi32>
    %7 = tpu.iota {dimensions = array<i32: 1>} : vector<128x128xi32>
    %8 = arith.cmpi sle, %6, %7 : vector<128x128xi32>
    %9 = arith.extui %8 : vector<128x128xi1> to vector<128x128xi32>
    %10 = arith.sitofp %9 : vector<128x128xi32> to vector<128x128xf32>
    %11 = arith.truncf %10 : vector<128x128xf32> to vector<128x128xbf16>
    %c0_6 = arith.constant 0 : index
    %c0_7 = arith.constant 0 : index
    %12 = vector.load %arg6[%c0_6, %c0_7] : memref<8x1xf32, #tpu.memory_space<vmem>>, vector<8x1xf32>
    %13 = arith.truncf %3 : vector<8x128xf32> to vector<8x128xbf16>
    %cst = arith.constant dense<0.000000e+00> : vector<8x128xf32>
    %14 = tpu.matmul %13, %11, %cst {dimension_numbers = #tpu.dot_dimension_numbers<[1], [0], [0], [1], [0, 0, 1, 1], [], []>} : vector<8x128xbf16>, vector<128x128xbf16>, vector<8x128xf32> -> vector<8x128xf32>
    %15 = vector.broadcast %12 : vector<8x1xf32> to vector<8x128xf32>
    %16 = arith.addf %15, %14 : vector<8x128xf32>
    %cst_8 = arith.constant dense<0.000000e+00> : vector<8xf32>
    %17 = vector.multi_reduction <add>, %3, %cst_8 [1] : vector<8x128xf32> to vector<8xf32>
    %18 = vector.shape_cast %17 : vector<8xf32> to vector<8x1xf32>
    %19 = arith.addf %12, %18 : vector<8x1xf32>
    %c0_9 = arith.constant 0 : index
    %c0_10 = arith.constant 0 : index
    %20 = vector.load %arg6[%c0_9, %c0_10] : memref<8x1xf32, #tpu.memory_space<vmem>>, vector<8x1xf32>
    tpu.vector_store %arg6[%c0_9, %c0_10], %19 {strides = array<i32>} : memref<8x1xf32, #tpu.memory_space<vmem>>, vector<8x1xf32>,
    %21 = tpu.iota {dimensions = array<i32: 1>} : vector<8x128xi32>
    %c128_i32 = arith.constant 128 : i32
    %22 = arith.muli %arg1, %c128_i32 : i32
    %23 = vector.broadcast %22 : i32 to vector<8x128xi32>
    %24 = arith.addi %21, %23 : vector<8x128xi32>
    %25 = arith.sitofp %24 : vector<8x128xi32> to vector<8x128xf32>
    %26 = vector.broadcast %5 : vector<8x1xf32> to vector<8x128xf32>
    %27 = arith.subf %26, %16 : vector<8x128xf32>
    %cst_11 = arith.constant 1.000000e+00 : f32
    %28 = vector.broadcast %cst_11 : f32 to vector<8x128xf32>
    %29 = arith.addf %25, %28 : vector<8x128xf32>
    %30 = vector.broadcast %5 : vector<8x1xf32> to vector<8x128xf32>
    %31 = arith.addf %30, %29 : vector<8x128xf32>
    %32 = arith.subf %31, %16 : vector<8x128xf32>
    %33 = arith.addf %27, %3 : vector<8x128xf32>
    %34 = vector.broadcast %5 : vector<8x1xf32> to vector<8x128xf32>
    %35 = arith.addf %34, %25 : vector<8x128xf32>
    %36 = arith.subf %35, %16 : vector<8x128xf32>
    %37 = arith.addf %36, %3 : vector<8x128xf32>
    %cst_12 = arith.constant 5.000000e-01 : f32
    %38 = vector.broadcast %cst_12 : f32 to vector<8x128xf32>
    %39 = arith.cmpf ogt, %37, %38 : vector<8x128xf32>
    %40 = arith.divf %27, %32 : vector<8x128xf32>
    %cst_13 = arith.constant 1.000000e+00 : f32
    %41 = vector.broadcast %cst_13 : f32 to vector<8x128xf32>
    %42 = arith.subf %41, %40 : vector<8x128xf32>
    %cst_14 = arith.constant 1.000000e+00 : f32
    %43 = vector.broadcast %cst_14 : f32 to vector<8x128xf32>
    %44 = arith.select %39, %33, %43 : vector<8x128xi1>, vector<8x128xf32>
    %cst_15 = arith.constant 1.000000e+00 : f32
    %45 = vector.broadcast %cst_15 : f32 to vector<8x128xf32>
    %46 = arith.select %39, %37, %45 : vector<8x128xi1>, vector<8x128xf32>
    %47 = arith.divf %44, %46 : vector<8x128xf32>
    %cst_16 = arith.constant 1.000000e+00 : f32
    %48 = vector.broadcast %cst_16 : f32 to vector<8x128xf32>
    %49 = arith.subf %48, %47 : vector<8x128xf32>
    %50 = arith.subf %42, %49 : vector<8x128xf32>
    %c0_17 = arith.constant 0 : index
    %c0_18 = arith.constant 0 : index
    %51 = vector.load %arg5[%c0_17, %c0_18] : memref<8x1xf32, #tpu.memory_space<vmem>>, vector<8x1xf32>
    %cst_19 = arith.constant 0.000000e+00 : f32
    %52 = vector.broadcast %cst_19 : f32 to vector<8x128xf32>
    %53 = arith.maximumf %4, %52 : vector<8x128xf32>
    %54 = arith.mulf %53, %50 : vector<8x128xf32>
    %cst_20 = arith.constant dense<0.000000e+00> : vector<8xf32>
    %55 = vector.multi_reduction <add>, %54, %cst_20 [1] : vector<8x128xf32> to vector<8xf32>
    %56 = vector.shape_cast %55 : vector<8xf32> to vector<8x1xf32>
    %57 = arith.addf %51, %56 : vector<8x1xf32>
    %c0_21 = arith.constant 0 : index
    %c0_22 = arith.constant 0 : index
    %58 = vector.load %arg5[%c0_21, %c0_22] : memref<8x1xf32, #tpu.memory_space<vmem>>, vector<8x1xf32>
    tpu.vector_store %arg5[%c0_21, %c0_22], %57 {strides = array<i32>} : memref<8x1xf32, #tpu.memory_space<vmem>>, vector<8x1xf32>,
    return
  }
  func.func @transform_0(%arg0: i32, %arg1: i32) -> (i32, i32) {
    %c0_i32 = arith.constant 0 : i32
    %c0_i32_0 = arith.constant 0 : i32
    return %arg0, %c0_i32 : i32, i32
  }
  func.func @transform_1(%arg0: i32, %arg1: i32) -> (i32, i32) {
    %c0_i32 = arith.constant 0 : i32
    return %arg0, %arg1 : i32, i32
  }
  func.func @transform_2(%arg0: i32, %arg1: i32) -> (i32, i32) {
    %c0_i32 = arith.constant 0 : i32
    return %arg0, %arg1 : i32, i32
  }
  func.func @transform_3(%arg0: i32, %arg1: i32) -> (i32, i32) {
    %c0_i32 = arith.constant 0 : i32
    %c0_i32_0 = arith.constant 0 : i32
    return %arg0, %c0_i32 : i32, i32
  }
}

</mosaic_0001>

<llo_original>
// kernel: tpu_custom_call.1
$region0: #{tpu_custom_call.1}
  #allocation0 [shape = 'u32[]', space=smem, size = 0x4, offset = 0x4, fixed_abs, tag = 'smem constant byte address 0x4 - core index']
  #allocation1 [shape = 'u32[72,128]{1,0:T(1,128)}', space=vmem, size = 0x9000, scoped, tag = 'internal scratch']
  #allocation2 [shape = 'f32[8,1]{1,0:T(8,128)}', space=vmem, size = 0x1000, scoped, tag = 'scratch operand']
  %s0 = inlined_call_operand.vmem [shape: f32[8,1], index: 0, kind: input, shape index: {}]
  %s1 = inlined_call_operand.hbm [shape: f32[8,256], index: 1, kind: input, shape index: {}]
  %s2 = inlined_call_operand.hbm [shape: f32[8,256], index: 2, kind: input, shape index: {}]
  %s3 = inlined_call_operand.vmem [shape: f32[8,1], index: 3, kind: output, shape index: {}]
  %s4 = sld [smem:[#allocation0]]
  $region57: #{tpu_custom_call.1} parent=0
    _
  %s6 = ssub.s32 1, %s4
  %s7 = scalar_select 0, %s6, %s4
  $region1: #{tpu_custom_call.1} parent=0
    #allocation3 [shape = 'u8[8192]{0}', space=vmem, size = 0x2000, scoped, tag = 'input window, operand 1']
    #allocation4 [shape = 's32[2]{0}', space=sflag, size = 0x8, scoped, tag = 'scoped memory for tpu_custom_call.1']
    #allocation5 [shape = 'u8[8192]{0}', space=vmem, size = 0x2000, scoped, tag = 'input window, operand 2']
    #allocation6 [shape = 's32[2]{0}', space=sflag, size = 0x8, scoped, tag = 'scoped memory for tpu_custom_call.1']
    %8 = vsyncpa [#allocation4], 0
    %s9 = scalar_lea.sflag [#allocation4], 1
    %10 = vsyncpa %s9, 0
    %11 = vsyncpa [#allocation6], 0
    %s12 = scalar_lea.sflag [#allocation6], 1
    %13 = vsyncpa %s12, 0
    loop: start=0, step=1, limit=4
    $region2: #{tpu_custom_call.1} parent=1 // loop_pre_header
      _
    $region3: #{tpu_custom_call.1} parent=1 // loop_header
      %s15 = sphi 0, %s19
      %p16 = scmp.ge.s32.totalorder %s15, 4
      %s22 = sphi 0, %s34
      %s23 = sphi 0, %s30
      %s24 = sphi 0, %s22
      %s25 = sphi 0, %s23
      %s26 = sphi 0, %s24
      %s27 = sphi 0, %s25
      %s37 = sphi 0, %s39
      %s40 = sphi 0, %s37
      %s41 = sphi 0, %s40
      %s57 = sphi 0, %s41
      %s65 = sphi 0, %s67
      %s68 = sphi 0, %s65
      %s69 = sphi 0, %s68
      %s85 = sphi 0, %s69
      %s93 = sphi 0, %s95
      %s96 = sphi 0, %s93
      %s97 = sphi 0, %s96
      %s113 = sphi 0, %s97
      %s119 = sphi 0, %s121
      %s122 = sphi 0, %s119
      %s123 = sphi 0, %s122
      %s139 = sphi 0, %s123
    $region4: #{tpu_custom_call.1} parent=1 // loop_header_branch
      %18 = sbr.rel (%p16) target = $region8
    $region5: #{tpu_custom_call.1} parent=1 // loop_body
      %s20 = ssub.s32 %s15, 1
      %s21 = ssub.s32 %s15, 2
      %s28 = sadd.s32 1, %s23
      %p29 = scmp.ge.s32.totalorder %s28, 2
      %s30 = scalar_select %p29, 0, %s28
      %s31 = sadd.s32 1, %s22
      %s32 = scalar_select %p29, %s31, %s22
      %p33 = scmp.ge.s32.totalorder %s32, 1
      %s34 = scalar_select %p33, 0, %s32
      %s35 = ssub.s32 %s22, %s34
      %p36 = scmp.eq.s32.totalorder %s35, 0
      %s38 = sadd.s32 %s37, 1
      %s39 = scalar_select %p36, %s37, %s38
      %p42 = pneg %p36
      %p43 = scmp.eq.s32.totalorder %s15, 1
      %p44 = por %p42, %p43
      %p45 = scmp.ne.s32.totalorder %s37, %s40
      %p46 = scmp.eq.s32.totalorder %s15, 0
      %p47 = por %p45, %p46
      %p48 = scmp.ne.s32.totalorder %s37, %s40
      %p49 = scmp.eq.s32.totalorder %s20, 1
      %p50 = por %p48, %p49
      %p51 = scmp.ne.s32.totalorder %s40, %s41
      %p52 = scmp.eq.s32.totalorder %s20, 0
      %p53 = por %p51, %p52
      %p54 = scmp.ne.s32.totalorder %s40, %s41
      %p55 = scmp.eq.s32.totalorder %s21, 1
      %p56 = por %p54, %p55
      %p58 = scmp.ne.s32.totalorder %s41, %s57
      %p59 = scmp.eq.s32.totalorder %s21, 0
      %p60 = por %p58, %p59
      %s61 = ssub.s32 %s22, %s34
      %s62 = ssub.s32 %s23, %s30
      %s63 = sor.u32 %s61, %s62
      %p64 = scmp.eq.s32.totalorder %s63, 0
      %s66 = sadd.s32 %s65, 1
      %s67 = scalar_select %p64, %s65, %s66
      %p70 = pneg %p64
      %p71 = scmp.eq.s32.totalorder %s15, 1
      %p72 = por %p70, %p71
      %p73 = scmp.ne.s32.totalorder %s65, %s68
      %p74 = scmp.eq.s32.totalorder %s15, 0
      %p75 = por %p73, %p74
      %p76 = scmp.ne.s32.totalorder %s65, %s68
      %p77 = scmp.eq.s32.totalorder %s20, 1
      %p78 = por %p76, %p77
      %p79 = scmp.ne.s32.totalorder %s68, %s69
      %p80 = scmp.eq.s32.totalorder %s20, 0
      %p81 = por %p79, %p80
      %p82 = scmp.ne.s32.totalorder %s68, %s69
      %p83 = scmp.eq.s32.totalorder %s21, 1
      %p84 = por %p82, %p83
      %p86 = scmp.ne.s32.totalorder %s69, %s85
      %p87 = scmp.eq.s32.totalorder %s21, 0
      %p88 = por %p86, %p87
      %s89 = ssub.s32 %s22, %s34
      %s90 = ssub.s32 %s23, %s30
      %s91 = sor.u32 %s89, %s90
      %p92 = scmp.eq.s32.totalorder %s91, 0
      %s94 = sadd.s32 %s93, 1
      %s95 = scalar_select %p92, %s93, %s94
      %p98 = pneg %p92
      %p99 = scmp.eq.s32.totalorder %s15, 1
      %p100 = por %p98, %p99
      %p101 = scmp.ne.s32.totalorder %s93, %s96
      %p102 = scmp.eq.s32.totalorder %s15, 0
      %p103 = por %p101, %p102
      %p104 = scmp.ne.s32.totalorder %s93, %s96
      %p105 = scmp.eq.s32.totalorder %s20, 1
      %p106 = por %p104, %p105
      %p107 = scmp.ne.s32.totalorder %s96, %s97
      %p108 = scmp.eq.s32.totalorder %s20, 0
      %p109 = por %p107, %p108
      %p110 = scmp.ne.s32.totalorder %s96, %s97
      %p111 = scmp.eq.s32.totalorder %s21, 1
      %p112 = por %p110, %p111
      %p114 = scmp.ne.s32.totalorder %s97, %s113
      %p115 = scmp.eq.s32.totalorder %s21, 0
      %p116 = por %p114, %p115
      %s117 = ssub.s32 %s22, %s34
      %p118 = scmp.eq.s32.totalorder %s117, 0
      %s120 = sadd.s32 %s119, 1
      %s121 = scalar_select %p118, %s119, %s120
      %p124 = pneg %p118
      %p125 = scmp.eq.s32.totalorder %s15, 1
      %p126 = por %p124, %p125
      %p127 = scmp.ne.s32.totalorder %s119, %s122
      %p128 = scmp.eq.s32.totalorder %s15, 0
      %p129 = por %p127, %p128
      %p130 = scmp.ne.s32.totalorder %s119, %s122
      %p131 = scmp.eq.s32.totalorder %s20, 1
      %p132 = por %p130, %p131
      %p133 = scmp.ne.s32.totalorder %s122, %s123
      %p134 = scmp.eq.s32.totalorder %s20, 0
      %p135 = por %p133, %p134
      %p136 = scmp.ne.s32.totalorder %s122, %s123
      %p137 = scmp.eq.s32.totalorder %s21, 1
      %p138 = por %p136, %p137
      %p140 = scmp.ne.s32.totalorder %s123, %s139
      %p141 = scmp.eq.s32.totalorder %s21, 0
      %p142 = por %p140, %p141
      %p143 = scmp.le.s32.totalorder 1, %s15
      %p144 = scmp.lt.s32.totalorder %s15, 3
      %p145 = pnand %p143, %p144
      %p146 = pneg %p145
      // Predicated region
      $region9: #{tpu_custom_call.1} parent=5 // pred_check
        _
      $region10: #{tpu_custom_call.1} parent=5 // pred_check_branch
        %148 = sbr.rel (%p145) target = $region12
      $region11: #{tpu_custom_call.1} parent=5 // pred_region
        %s149 = ssub.s32 %s15, 1
        // Predicated region
        $region13: #{tpu_custom_call.1} parent=11 // pred_check
          %p150 = pneg %p53
        $region14: #{tpu_custom_call.1} parent=11 // pred_check_branch
          %152 = sbr.rel (%p150) target = $region16
        $region15: #{tpu_custom_call.1} parent=11 // pred_region
          %p153 = scmp.lt.s32.totalorder %s24, 0
          %s154 = scalar_select %p153, %s24, 0
          %s155 = smul.addr %s154, 8
          %s156 = scalar_lea.vmem %s0, %s155
        $region16: #{tpu_custom_call.1} parent=11 // pred_fallthru
          _
      $region12: #{tpu_custom_call.1} parent=5 // pred_fallthru
        _
      %p157 = scmp.lt.s32.totalorder %s15, 2
      // Predicated region
      $region17: #{tpu_custom_call.1} parent=5 // pred_check
        %p158 = pneg %p157
      $region18: #{tpu_custom_call.1} parent=5 // pred_check_branch
        %160 = sbr.rel (%p158) target = $region20
      $region19: #{tpu_custom_call.1} parent=5 // pred_region
        // Predicated region
        $region21: #{tpu_custom_call.1} parent=19 // pred_check
          %p161 = pneg %p75
        $region22: #{tpu_custom_call.1} parent=19 // pred_check_branch
          %163 = sbr.rel (%p161) target = $region24
        $region23: #{tpu_custom_call.1} parent=19 // pred_region
          %s164 = sand.u32 %s65, 1
          %s165 = scalar_lea.sflag [#allocation4], %s164
          %s166 = sand.u32 %s65, 1
          %s167 = smul.addr %s166, 8
          %s168 = scalar_lea.vmem [#allocation3], %s167
          %170 = vsyncadd %s165, 0
          %s171 = smul.addr %s22, 2
          %s172 = sadd.s32 %s23, %s171
          %s173 = smul.addr %s172, 8
          %s174 = scalar_lea.hbm %s1, %s173
          %s176 = sshll.u32 %s174, 4
          %s177 = int_to_ptr.hbm [resolvable:$true] %s176
          %s178 = sshll.u32 %s168, 4
          %s179 = int_to_ptr.vmem [resolvable:$true] %s178
          %181 = dma.hbm_to_vmem [thread:$0]  %s177, 128, %s179, %s165
        $region24: #{tpu_custom_call.1} parent=19 // pred_fallthru
          _
        // Predicated region
        $region25: #{tpu_custom_call.1} parent=19 // pred_check
          %p182 = pneg %p103
        $region26: #{tpu_custom_call.1} parent=19 // pred_check_branch
          %184 = sbr.rel (%p182) target = $region28
        $region27: #{tpu_custom_call.1} parent=19 // pred_region
          %s185 = sand.u32 %s93, 1
          %s186 = scalar_lea.sflag [#allocation6], %s185
          %s187 = sand.u32 %s93, 1
          %s188 = smul.addr %s187, 8
          %s189 = scalar_lea.vmem [#allocation5], %s188
          %191 = vsyncadd %s186, 0
          %s192 = smul.addr %s22, 2
          %s193 = sadd.s32 %s23, %s192
          %s194 = smul.addr %s193, 8
          %s195 = scalar_lea.hbm %s2, %s194
          %s197 = sshll.u32 %s195, 4
          %s198 = int_to_ptr.hbm [resolvable:$true] %s197
          %s199 = sshll.u32 %s189, 4
          %s200 = int_to_ptr.vmem [resolvable:$true] %s199
          %202 = dma.hbm_to_vmem [thread:$0]  %s198, 128, %s200, %s186
        $region28: #{tpu_custom_call.1} parent=19 // pred_fallthru
          _
      $region20: #{tpu_custom_call.1} parent=5 // pred_fallthru
        _
      %p203 = scmp.le.s32.totalorder 1, %s15
      %p204 = scmp.lt.s32.totalorder %s15, 3
      %p205 = pnand %p203, %p204
      %p206 = pneg %p205
      // Predicated region
      $region29: #{tpu_custom_call.1} parent=5 // pred_check
        _
      $region30: #{tpu_custom_call.1} parent=5 // pred_check_branch
        %208 = sbr.rel (%p205) target = $region32
      $region31: #{tpu_custom_call.1} parent=5 // pred_region
        %s209 = ssub.s32 %s15, 1
        %s210 = sand.u32 %s68, 1
        %s211 = scalar_lea.sflag [#allocation4], %s210
        %s212 = sand.u32 %s68, 1
        %s213 = smul.addr %s212, 8
        %s214 = scalar_lea.vmem [#allocation3], %s213
        // Predicated region
        $region33: #{tpu_custom_call.1} parent=31 // pred_check
          %p215 = pneg %p81
        $region34: #{tpu_custom_call.1} parent=31 // pred_check_branch
          %217 = sbr.rel (%p215) target = $region36
        $region35: #{tpu_custom_call.1} parent=31 // pred_region
          %219 = dma.done %s211, 128
        $region36: #{tpu_custom_call.1} parent=31 // pred_fallthru
          _
        %s220 = sand.u32 %s96, 1
        %s221 = scalar_lea.sflag [#allocation6], %s220
        %s222 = sand.u32 %s96, 1
        %s223 = smul.addr %s222, 8
        %s224 = scalar_lea.vmem [#allocation5], %s223
        // Predicated region
        $region37: #{tpu_custom_call.1} parent=31 // pred_check
          %p225 = pneg %p109
        $region38: #{tpu_custom_call.1} parent=31 // pred_check_branch
          %227 = sbr.rel (%p225) target = $region40
        $region39: #{tpu_custom_call.1} parent=31 // pred_region
          %229 = dma.done %s221, 128
        $region40: #{tpu_custom_call.1} parent=31 // pred_fallthru
          _
        %p230 = scmp.lt.s32.totalorder %s24, 0
        %s231 = scalar_select %p230, %s24, 0
        %s232 = smul.addr %s231, 8
        %s233 = scalar_lea.vmem %s0, %s232
        %p234 = pneg %p53
        %p235 = pneg %p50
        %s236 = sand.u32 %s68, 1
        %s237 = scalar_lea.sflag [#allocation4], %s236
        %s238 = sand.u32 %s68, 1
        %s239 = smul.addr %s238, 8
        %s240 = scalar_lea.vmem [#allocation3], %s239
        %p241 = pneg %p81
        %p242 = pneg %p78
        %s243 = sand.u32 %s96, 1
        %s244 = scalar_lea.sflag [#allocation6], %s243
        %s245 = sand.u32 %s96, 1
        %s246 = smul.addr %s245, 8
        %s247 = scalar_lea.vmem [#allocation5], %s246
        %p248 = pneg %p109
        %p249 = pneg %p106
        %p250 = pneg %p135
        %p251 = pneg %p132
        %p252 = scmp.lt.s32.totalorder %s24, 0
        %s253 = scalar_select %p252, %s24, 0
        %s254 = smul.addr %s253, 8
        %s255 = scalar_lea.vmem %s3, %s254
        %p256 = scmp.lt.s32.totalorder %s24, 0
        %s257 = scalar_select %p256, %s24, 0
        %s258 = smul.addr %s257, 8
        %s259 = scalar_lea.vmem %s0, %s258
        %p260 = scmp.lt.s32.totalorder %s24, 0
        %s261 = scalar_select %p260, %s24, 0
        %s262 = smul.addr %s261, 8
        %s263 = scalar_lea.vmem %s3, %s262
        %p264 = scmp.eq.s32.totalorder %s25, 0
        // Predicated region
        $region41: #{tpu_custom_call.1} parent=31 // pred_check
          %p265 = pneg %p264
        $region42: #{tpu_custom_call.1} parent=31 // pred_check_branch
          %267 = sbr.rel (%p265) target = $region44
        $region43: #{tpu_custom_call.1} parent=31 // pred_region
          %vm268 = vcmask 7168
          %269 = vst.msk [vmem:[#allocation2] sm:$0xff] %vm268, 0.0
          %270 = vst.msk [vmem:[%s263] sm:$0xff] %vm268, 0.0
        $region44: #{tpu_custom_call.1} parent=31 // pred_fallthru
          _
        %v271 = vld [vmem:[%s224] sm:$0xff]
        %v272 = vld [vmem:[%s214] sm:$0xff]
        %v273 = vld [vmem:[%s259] sm:$0xff]
        %v274 = vlaneseq
        %v275 = vshrl.u32 %v274, 7
        %v276 = vadd.s32 %v275, 8
        %v277 = vadd.s32 %v275, 16
        %v278 = vadd.s32 %v275, 24
        %v279 = vadd.s32 %v275, 32
        %v280 = vadd.s32 %v275, 40
        %v281 = vadd.s32 %v275, 48
        %v282 = vadd.s32 %v275, 56
        %v283 = vadd.s32 %v275, 64
        %v284 = vadd.s32 %v275, 72
        %v285 = vadd.s32 %v275, 80
        %v286 = vadd.s32 %v275, 88
        %v287 = vadd.s32 %v275, 96
        %v288 = vadd.s32 %v275, 104
        %v289 = vadd.s32 %v275, 112
        %v290 = vadd.s32 %v275, 120
        %v291 = vlaneseq
        %v292 = vand.u32 %v291, 127
        %vm293 = vcmp.le.s32.totalorder %v275, %v292
        %vm294 = vcmp.le.s32.totalorder %v276, %v292
        %vm295 = vcmp.le.s32.totalorder %v277, %v292
        %vm296 = vcmp.le.s32.totalorder %v278, %v292
        %vm297 = vcmp.le.s32.totalorder %v279, %v292
        %vm298 = vcmp.le.s32.totalorder %v280, %v292
        %vm299 = vcmp.le.s32.totalorder %v281, %v292
        %vm300 = vcmp.le.s32.totalorder %v282, %v292
        %vm301 = vcmp.le.s32.totalorder %v283, %v292
        %vm302 = vcmp.le.s32.totalorder %v284, %v292
        %vm303 = vcmp.le.s32.totalorder %v285, %v292
        %vm304 = vcmp.le.s32.totalorder %v286, %v292
        %vm305 = vcmp.le.s32.totalorder %v287, %v292
        %vm306 = vcmp.le.s32.totalorder %v288, %v292
        %vm307 = vcmp.le.s32.totalorder %v289, %v292
        %vm308 = vcmp.le.s32.totalorder %v290, %v292
        %v309 = vsel %vm293, 1, 0
        %v310 = vsel %vm294, 1, 0
        %v311 = vsel %vm295, 1, 0
        %v312 = vsel %vm296, 1, 0
        %v313 = vsel %vm297, 1, 0
        %v314 = vsel %vm298, 1, 0
        %v315 = vsel %vm299, 1, 0
        %v316 = vsel %vm300, 1, 0
        %v317 = vsel %vm301, 1, 0
        %v318 = vsel %vm302, 1, 0
        %v319 = vsel %vm303, 1, 0
        %v320 = vsel %vm304, 1, 0
        %v321 = vsel %vm305, 1, 0
        %v322 = vsel %vm306, 1, 0
        %v323 = vsel %vm307, 1, 0
        %v324 = vsel %vm308, 1, 0
        %v325 = vcvt.s32.f32 %v309
        %v326 = vcvt.s32.f32 %v310
        %v327 = vcvt.s32.f32 %v311
        %v328 = vcvt.s32.f32 %v312
        %v329 = vcvt.s32.f32 %v313
        %v330 = vcvt.s32.f32 %v314
        %v331 = vcvt.s32.f32 %v315
        %v332 = vcvt.s32.f32 %v316
        %v333 = vcvt.s32.f32 %v317
        %v334 = vcvt.s32.f32 %v318
        %v335 = vcvt.s32.f32 %v319
        %v336 = vcvt.s32.f32 %v320
        %v337 = vcvt.s32.f32 %v321
        %v338 = vcvt.s32.f32 %v322
        %v339 = vcvt.s32.f32 %v323
        %v340 = vcvt.s32.f32 %v324
        %v341 = vpack.c.bf16 %v326, %v325
        %v342 = vpack.c.bf16 %v328, %v327
        %v343 = vpack.c.bf16 %v330, %v329
        %v344 = vpack.c.bf16 %v332, %v331
        %v345 = vpack.c.bf16 %v334, %v333
        %v346 = vpack.c.bf16 %v336, %v335
        %v347 = vpack.c.bf16 %v338, %v337
        %v348 = vpack.c.bf16 %v340, %v339
        %v349 = vld [vmem:[#allocation2] sm:$0xff]
        %v350 = vpack.c.bf16 %v271, %v271
        %351 = vmatpush.bf16.msra.mxu0 %v348
        %352 = vmatpush.bf16.msra.mxu0 %v347
        %353 = vmatpush.bf16.msra.mxu0 %v346
        %354 = vmatpush.bf16.msra.mxu0 %v345
        %355 = vmatpush.bf16.msra.mxu0 %v344
        %356 = vmatpush.bf16.msra.mxu0 %v343
        %357 = vmatpush.bf16.msra.mxu0 %v342
        %358 = vmatpush.bf16.msra.mxu0 %v341
        %359 = vmatmul.bf16.gmra.mxu0 %v350
        %v360 = vpop.f32.mrf.mxu0
        %v361 = vadd.f32 0.0, %v360
        %v362 = vpop.f32.mrf.mxu0
        %363 = vdwg.mxu0
        %365 = vset.pattern.permute.xlu0 0
        %366 = vperm.xlu0 %365, %v349
        %v367 = vpop.permute.xlu0 %366
        %v369 = vadd.f32 %v367, %v361
        %370 = vadd.xlane.f32.xlu0 %v271
        %v371 = vpop.xlane.xlu0 %370
        %v372 = vadd.f32 %v349, %v371
        %vm373 = vcmask 7168
        %374 = vst.msk [vmem:[#allocation2] sm:$0xff] %vm373, %v372
        %s375 = smul.u32 %s25, 128
        %v376 = vstv %s375
        %v377 = vadd.s32 %v292, %v376
        %v378 = vcvt.s32.f32 %v377
        %380 = vset.pattern.permute.xlu0 0
        %381 = vperm.xlu0 %380, %v273
        %v382 = vpop.permute.xlu0 %381
        %v384 = vsub.f32 %v382, %v369
        %v385 = vadd.f32 %v378, 1.0
        %v386 = vadd.f32 %v382, %v385
        %v387 = vsub.f32 %v386, %v369
        %v388 = vadd.f32 %v384, %v271
        %v389 = vadd.f32 %v382, %v378
        %v390 = vsub.f32 %v389, %v369
        %v391 = vadd.f32 %v390, %v271
        %vm392 = vcmp.gt.f32.partialorder %v391, 0.5
        %v393 = vrcp.pop %v387
        %v394 = vmul.f32 %v387, %v393
        %v395 = vsub.f32 1.0, %v394
        %v396 = vmul.f32 %v393, %v395
        %v397 = vadd.f32 %v393, %v396
        %vm398 = vweird.f32 %v387
        %vm399 = vweird.f32 %v393
        %vm400 = vmor %vm398, %vm399
        %v401 = vsel %vm400, %v393, %v397
        %v402 = vand.u32 2147483647, %v387
        %vm403 = vcmp.eq.f32.partialorder %v402, 8.507059e+37
        %v404 = vand.u32 %v387, 2147483648
        %v405 = vor.u32 1.1754944e-38, %v404
        %v406 = vsel %vm403, %v405, %v401
        %v407 = vmul.f32 %v384, %v406
        %v408 = vsub.f32 1.0, %v407
        %v409 = vsel %vm392, %v388, 1.0
        %v410 = vsel %vm392, %v391, 1.0
        %v411 = vrcp.pop %v410
        %v412 = vmul.f32 %v410, %v411
        %v413 = vsub.f32 1.0, %v412
        %v414 = vmul.f32 %v411, %v413
        %v415 = vadd.f32 %v411, %v414
        %vm416 = vweird.f32 %v410
        %vm417 = vweird.f32 %v411
        %vm418 = vmor %vm416, %vm417
        %v419 = vsel %vm418, %v411, %v415
        %v420 = vand.u32 2147483647, %v410
        %vm421 = vcmp.eq.f32.partialorder %v420, 8.507059e+37
        %v422 = vand.u32 %v410, 2147483648
        %v423 = vor.u32 1.1754944e-38, %v422
        %v424 = vsel %vm421, %v423, %v419
        %v425 = vmul.f32 %v409, %v424
        %v426 = vsub.f32 1.0, %v425
        %v427 = vsub.f32 %v408, %v426
        %v428 = vld [vmem:[%s263] sm:$0xff]
        %v429 = vmax.f32 %v272, 0.0
        %v430 = vmul.f32 %v429, %v427
        %431 = vadd.xlane.f32.xlu0 %v430
        %v432 = vpop.xlane.xlu0 %431
        %v433 = vadd.f32 %v428, %v432
        %434 = vst.msk [vmem:[%s263] sm:$0xff] %vm373, %v433
        %p435 = scmp.lt.s32.totalorder %s24, 0
        %s436 = scalar_select %p435, %s24, 0
        %s437 = smul.addr %s436, 8
        %s438 = scalar_lea.vmem %s3, %s437
        // Predicated region
        $region45: #{tpu_custom_call.1} parent=31 // pred_check
          %p439 = pneg %p132
        $region46: #{tpu_custom_call.1} parent=31 // pred_check_branch
          %441 = sbr.rel (%p439) target = $region48
        $region47: #{tpu_custom_call.1} parent=31 // pred_region
          _
        $region48: #{tpu_custom_call.1} parent=31 // pred_fallthru
          _
        // Predicated region
        $region49: #{tpu_custom_call.1} parent=31 // pred_check
          %p442 = pneg %p132
        $region50: #{tpu_custom_call.1} parent=31 // pred_check_branch
          %444 = sbr.rel (%p442) target = $region52
        $region51: #{tpu_custom_call.1} parent=31 // pred_region
          %p445 = scmp.lt.s32.totalorder %s24, 0
          %s446 = scalar_select %p445, %s24, 0
          %s447 = smul.addr %s446, 8
          %s448 = scalar_lea.vmem %s3, %s447
        $region52: #{tpu_custom_call.1} parent=31 // pred_fallthru
          _
      $region32: #{tpu_custom_call.1} parent=5 // pred_fallthru
        _
      %p449 = scmp.le.s32.totalorder 2, %s15
      // Predicated region
      $region53: #{tpu_custom_call.1} parent=5 // pred_check
        %p450 = pneg %p449
      $region54: #{tpu_custom_call.1} parent=5 // pred_check_branch
        %452 = sbr.rel (%p450) target = $region56
      $region55: #{tpu_custom_call.1} parent=5 // pred_region
        %s453 = ssub.s32 %s15, 2
      $region56: #{tpu_custom_call.1} parent=5 // pred_fallthru
        _
    $region6: #{tpu_custom_call.1} parent=1 // loop_footer
      %s19 = sadd.s32 1, %s15
    $region7: #{tpu_custom_call.1} parent=1 // loop_footer_branch
      %14 = sbr.rel target = $region3
    $region8: #{tpu_custom_call.1} parent=1 // loop_exit
      _
    %454 = vsyncpa [#allocation4], 1
    %s455 = scalar_lea.sflag [#allocation4], 1
    %456 = vsyncpa %s455, 1
    %457 = vsyncpa [#allocation6], 1
    %s458 = scalar_lea.sflag [#allocation6], 1
    %459 = vsyncpa %s458, 1

</llo_original>
